<compile_context>
chip_gen: v7x
topology: tpu7x:2x2x1
jax: 0.10.0
libtpu: 0.0.40
codegen_flags: <defaults>
</compile_context>

<pallas_src>
import functools
import math

import jax
import jax.numpy as jnp
from jax.experimental import pallas as pl
from jax.experimental.pallas import tpu as pltpu

_PI = math.pi
_TINY = 1e-30


def _round_up(x, m):
    return ((x + m - 1) // m) * m


# --------------------------------------------------------------------------
# elementwise helpers (mul/add/select on VALU, sqrt/rsqrt on EUP; no divides)
# --------------------------------------------------------------------------
def _acos(c):
    """arccos(c), c in [-1,1], via A&S 4.4.46 minimax poly (|err| ~ 1e-7)."""
    c = jnp.clip(c, -1.0, 1.0)
    a = jnp.abs(c)
    p = jnp.float32(-0.0012624911)
    for coef in (0.0066700901, -0.0170881256, 0.0308918810, -0.0501743046,
                 0.0889789874, -0.2145988016, 1.5707963050):
        p = p * a + jnp.float32(coef)
    r = jnp.sqrt(jnp.maximum(1.0 - a, 0.0)) * p
    return jnp.where(c >= 0.0, r, jnp.float32(_PI) - r)


def _edge_dihedral_angles(g_ref):
    """g_ref: (12, TILE_R, 128) ref, channel index = coord*4 + point.

    Returns the (TILE_R, 128) lane-dense dihedral angles (f32).
    """
    def pt(j):
        return tuple(g_ref[4 * c + j].astype(jnp.float32) for c in range(3))

    p0, p1, p2, p3 = pt(0), pt(1), pt(2), pt(3)

    sub = lambda a, b: tuple(x - y for x, y in zip(a, b))

    def cross(a, b):
        return (a[1] * b[2] - a[2] * b[1],
                a[2] * b[0] - a[0] * b[2],
                a[0] * b[1] - a[1] * b[0])

    dot = lambda a, b: a[0] * b[0] + a[1] * b[1] + a[2] * b[2]

    # normals of face A (p0,p1,p2) and face B (p1,p0,p3), MeshCNN convention
    n_a = cross(sub(p2, p0), sub(p1, p0))
    n_b = cross(sub(p3, p1), sub(p0, p1))
    inv = (jax.lax.rsqrt(jnp.maximum(dot(n_a, n_a), _TINY)) *
           jax.lax.rsqrt(jnp.maximum(dot(n_b, n_b), _TINY)))
    cos_ang = dot(n_a, n_b) * inv
    # pi - acos(c) == acos(-c)
    return _acos(-cos_ang)


def _accumulate(acc_ref, out_ref, val, t_axis):
    """Sum (TILE_R,128) val into an (8,128) scratch; finalize on last tile."""
    t = pl.program_id(t_axis)

    @pl.when(t == 0)
    def _():
        acc_ref[...] = jnp.zeros_like(acc_ref)

    acc_ref[...] += jnp.sum(val.reshape(-1, 8, 128), axis=0)

    @pl.when(t == pl.num_programs(t_axis) - 1)
    def _():
        out_ref[...] = jnp.sum(acc_ref[...], keepdims=True)


# --------------------------------------------------------------------------
# kernels
# --------------------------------------------------------------------------
def _pair_kernel(g1_ref, g2_ref, out_ref, acc_ref):
    d = _edge_dihedral_angles(g1_ref) - _edge_dihedral_angles(g2_ref)
    _accumulate(acc_ref, out_ref, d * d, t_axis=2)


def _hinge_kernel(g_ref, out_ref, acc_ref):
    h = jnp.maximum(jnp.float32(0.25 * _PI) - _edge_dihedral_angles(g_ref), 0.0)
    _accumulate(acc_ref, out_ref, h * h, t_axis=2)


# --------------------------------------------------------------------------
# wrapper
# --------------------------------------------------------------------------
def mesh_dihedral_angle_loss(vert1, vert2=None, edge_points=None,
                             reduction="mean", threshold=_PI / 6,
                             input_dtype=jnp.bfloat16, max_tile_rows=None):
    """Pallas implementation of MeshDihedralAngleLoss.forward.

    vert1, vert2: (B, N, 3).  edge_points: (E, 4) int vertex indices.
    """
    del threshold  # reference forward ignores it (pi/4 hard-coded)
    assert edge_points is not None
    vert1 = jnp.asarray(vert1)
    B, _, C = vert1.shape
    assert C == 3, "vertices must be (B, N, 3)"
    ep = jnp.asarray(edge_points, dtype=jnp.int32)
    E = ep.shape[0]

    itemsize = jnp.dtype(input_dtype).itemsize
    if max_tile_rows is None:
        # ~768 KiB per (12, TILE_R, 128) input block; 32K edges/step for bf16.
        max_tile_rows = 256 if itemsize <= 2 else 128

    rows = -(-E // 128)
    # 2-way core split of the edge axis when the batch axis can't feed 2 TCs.
    n_splits = 2 if (B == 1 and rows >= 16) else 1
    rows_per_split = -(-rows // n_splits)
    tile_r = min(int(max_tile_rows), _round_up(rows_per_split, 8))
    tiles_per_split = -(-rows_per_split // tile_r)
    rows_pad = n_splits * tiles_per_split * tile_r
    e_pad = rows_pad * 128

    # Padded edges index vertex 0 four times -> zero face normals -> angle is
    # exactly pi/2 -> zero contribution in both branches (no in-kernel mask).
    ep = jnp.pad(ep, ((0, e_pad - E), (0, 0)))
    idx = ep.T.reshape(-1)                       # point-major, (4 * e_pad,)

    def gather(v):
        # (B,N,3) -> (B,3,N) -> gather -> (B,3,4*e_pad) -> (B,12,rows_pad,128)
        # channel = coord*4 + point; no transpose of the big gathered tensor.
        v_cm = jnp.swapaxes(jnp.asarray(v), 1, 2).astype(input_dtype)
        g = jnp.take(v_cm, idx, axis=2)
        return g.reshape(B, 12, rows_pad, 128)

    in_spec = pl.BlockSpec((None, 12, tile_r, 128),
                           lambda b, s, t: (b, 0, s * tiles_per_split + t, 0))
    out_spec = pl.BlockSpec((None, None, 1, 1), lambda b, s, t: (b, s, 0, 0))
    out_shape = jax.ShapeDtypeStruct((B, n_splits, 1, 1), jnp.float32)
    grid = (B, n_splits, tiles_per_split)
    cparams = pltpu.CompilerParams(
        dimension_semantics=("parallel", "parallel", "arbitrary"),
        vmem_limit_bytes=32 * 1024 * 1024)
    scratch = [pltpu.VMEM((8, 128), jnp.float32)]

    g1 = gather(vert1)
    if vert2 is not None:
        sums = pl.pallas_call(
            _pair_kernel,
            out_shape=out_shape,
            grid_spec=pltpu.PrefetchScalarGridSpec(
                num_scalar_prefetch=0, grid=grid,
                in_specs=[in_spec, in_spec], out_specs=out_spec,
                scratch_shapes=scratch),
            compiler_params=cparams,
        )(g1, gather(vert2))
    else:
        sums = pl.pallas_call(
            _hinge_kernel,
            out_shape=out_shape,
            grid_spec=pltpu.PrefetchScalarGridSpec(
                num_scalar_prefetch=0, grid=grid,
                in_specs=[in_spec], out_specs=out_spec,
                scratch_shapes=scratch),
            compiler_params=cparams,
        )(g1)

    per_batch = jnp.sum(sums.reshape(B, n_splits), axis=1) / jnp.float32(E)
    if reduction != "none":
        return jnp.mean(per_batch)
    return per_batch


# --------------------------------------------------------------------------
# plain-JAX reference (sanity check only)
# --------------------------------------------------------------------------
def _reference_loss(vert1, vert2, edge_points, reduction="mean"):
    ep = jnp.asarray(edge_points, dtype=jnp.int32)

    def angles(v):
        p = v[:, ep, :]                                    # (B, E, 4, 3)
        p0, p1, p2, p3 = (p[:, :, i, :] for i in range(4))
        n_a = jnp.cross(p2 - p0, p1 - p0)
        n_b = jnp.cross(p3 - p1, p0 - p1)
        n_a = n_a * jax.lax.rsqrt(
            jnp.maximum(jnp.sum(n_a * n_a, -1, keepdims=True), _TINY))
        n_b = n_b * jax.lax.rsqrt(
            jnp.maximum(jnp.sum(n_b * n_b, -1, keepdims=True), _TINY))
        c = jnp.clip(jnp.sum(n_a * n_b, -1), -1.0, 1.0)
        return jnp.pi - jnp.arccos(c)

    a1 = angles(vert1)
    if vert2 is not None:
        per_b = jnp.mean((a1 - angles(vert2)) ** 2, axis=1)
    else:
        h = jnp.maximum(jnp.pi / 4 - a1, 0.0)
        per_b = jnp.mean(h * h, axis=1)
    return jnp.mean(per_b) if reduction != "none" else per_b


if __name__ == "__main__":
    key = jax.random.PRNGKey(0)
    k1, k2, k3, k4 = jax.random.split(key, 4)
    B, N, E = 2, 64, 200
    vert1 = jax.random.normal(k1, (B, N, 3), dtype=jnp.float32)
    vert2 = vert1 + 0.05 * jax.random.normal(k2, (B, N, 3), dtype=jnp.float32)
    edge_points = jax.random.randint(k3, (E, 4), 0, N, dtype=jnp.int32)

    # --- f32-input path, checked tightly against the plain-JAX reference ---
    pair_f32 = jax.jit(functools.partial(mesh_dihedral_angle_loss,
                                         edge_points=edge_points,
                                         input_dtype=jnp.float32))
    hinge_f32 = jax.jit(lambda v: mesh_dihedral_angle_loss(
        v, None, edge_points=edge_points, input_dtype=jnp.float32))
    loss_pair = pair_f32(vert1, vert2)
    loss_hinge = hinge_f32(vert1)
    jax.block_until_ready((loss_pair, loss_hinge))
    assert loss_pair.shape == () and bool(jnp.isfinite(loss_pair))
    assert loss_hinge.shape == () and bool(jnp.isfinite(loss_hinge))
    ref_pair = _reference_loss(vert1, vert2, edge_points)
    ref_hinge = _reference_loss(vert1, None, edge_points)
    assert jnp.allclose(loss_pair, ref_pair, rtol=1e-3, atol=1e-6), (loss_pair, ref_pair)
    assert jnp.allclose(loss_hinge, ref_hinge, rtol=1e-3, atol=1e-6), (loss_hinge, ref_hinge)

    # --- default bf16-input path: compare against the reference evaluated on
    #     bf16-rounded vertices (isolates the in-kernel approximation) ---
    pair_bf16 = jax.jit(functools.partial(mesh_dihedral_angle_loss,
                                          edge_points=edge_points))
    hinge_bf16 = jax.jit(lambda v: mesh_dihedral_angle_loss(
        v, None, edge_points=edge_points))
    loss_pair_b = pair_bf16(vert1, vert2)
    loss_hinge_b = hinge_bf16(vert1)
    jax.block_until_ready((loss_pair_b, loss_hinge_b))
    v1q = vert1.astype(jnp.bfloat16).astype(jnp.float32)
    v2q = vert2.astype(jnp.bfloat16).astype(jnp.float32)
    ref_pair_b = _reference_loss(v1q, v2q, edge_points)
    ref_hinge_b = _reference_loss(v1q, None, edge_points)
    assert jnp.allclose(loss_pair_b, ref_pair_b, rtol=5e-3, atol=1e-6), (loss_pair_b, ref_pair_b)
    assert jnp.allclose(loss_hinge_b, ref_hinge_b, rtol=5e-3, atol=1e-6), (loss_hinge_b, ref_hinge_b)

    # --- B == 1 with >= 2048 edges exercises the 2-way core-split grid path ---
    E1 = 2048
    edge_points1 = jax.random.randint(k4, (E1, 4), 0, N, dtype=jnp.int32)
    loss_split = jax.jit(lambda v: mesh_dihedral_angle_loss(
        v, None, edge_points=edge_points1, input_dtype=jnp.float32))(vert1[:1])
    jax.block_until_ready(loss_split)
    ref_split = _reference_loss(vert1[:1], None, edge_points1)
    assert jnp.allclose(loss_split, ref_split, rtol=1e-3, atol=1e-6), (loss_split, ref_split)

    print("KERNEL_OK")
</pallas_src>

<mosaic_0001>
module attributes {stable_mosaic.version = 11 : i64} {
  func.func @_pair_kernel(%arg0: i32, %arg1: i32, %arg2: i32, %arg3: memref<1x12x8x128xf32, #tpu.memory_space<vmem>>, %arg4: memref<1x12x8x128xf32, #tpu.memory_space<vmem>>, %arg5: memref<1x1x1x1xf32, #tpu.memory_space<vmem>>, %arg6: memref<8x128xf32, #tpu.memory_space<vmem>>) attributes {dimension_semantics = [#tpu.dimension_semantics<parallel>, #tpu.dimension_semantics<parallel>, #tpu.dimension_semantics<arbitrary>], iteration_bounds = array<i64: 2, 1, 1>, scalar_prefetch = 0 : i64, scratch_operands = 1 : i64, tpu.core_type = #tpu.core_type<tc>, window_params = [{transform_indices = @transform_0, window_bounds = array<i64: 1, 12, 8, 128>}, {transform_indices = @transform_1, window_bounds = array<i64: 1, 12, 8, 128>}, {transform_indices = @transform_2, window_bounds = array<i64: 1, 1, 1, 1>}]} {
    %c0 = arith.constant 0 : index
    %c0_0 = arith.constant 0 : index
    %c0_1 = arith.constant 0 : index
    %c0_2 = arith.constant 0 : index
    %0 = vector.load %arg3[%c0, %c0_0, %c0_1, %c0_2] : memref<1x12x8x128xf32, #tpu.memory_space<vmem>>, vector<1x1x8x128xf32>
    %1 = vector.shape_cast %0 : vector<1x1x8x128xf32> to vector<8x128xf32>
    %c0_3 = arith.constant 0 : index
    %c4 = arith.constant 4 : index
    %c0_4 = arith.constant 0 : index
    %c0_5 = arith.constant 0 : index
    %2 = vector.load %arg3[%c0_3, %c4, %c0_4, %c0_5] : memref<1x12x8x128xf32, #tpu.memory_space<vmem>>, vector<1x1x8x128xf32>
    %3 = vector.shape_cast %2 : vector<1x1x8x128xf32> to vector<8x128xf32>
    %c0_6 = arith.constant 0 : index
    %c8 = arith.constant 8 : index
    %c0_7 = arith.constant 0 : index
    %c0_8 = arith.constant 0 : index
    %4 = vector.load %arg3[%c0_6, %c8, %c0_7, %c0_8] : memref<1x12x8x128xf32, #tpu.memory_space<vmem>>, vector<1x1x8x128xf32>
    %5 = vector.shape_cast %4 : vector<1x1x8x128xf32> to vector<8x128xf32>
    %c0_9 = arith.constant 0 : index
    %c1 = arith.constant 1 : index
    %c0_10 = arith.constant 0 : index
    %c0_11 = arith.constant 0 : index
    %6 = vector.load %arg3[%c0_9, %c1, %c0_10, %c0_11] : memref<1x12x8x128xf32, #tpu.memory_space<vmem>>, vector<1x1x8x128xf32>
    %7 = vector.shape_cast %6 : vector<1x1x8x128xf32> to vector<8x128xf32>
    %c0_12 = arith.constant 0 : index
    %c5 = arith.constant 5 : index
    %c0_13 = arith.constant 0 : index
    %c0_14 = arith.constant 0 : index
    %8 = vector.load %arg3[%c0_12, %c5, %c0_13, %c0_14] : memref<1x12x8x128xf32, #tpu.memory_space<vmem>>, vector<1x1x8x128xf32>
    %9 = vector.shape_cast %8 : vector<1x1x8x128xf32> to vector<8x128xf32>
    %c0_15 = arith.constant 0 : index
    %c9 = arith.constant 9 : index
    %c0_16 = arith.constant 0 : index
    %c0_17 = arith.constant 0 : index
    %10 = vector.load %arg3[%c0_15, %c9, %c0_16, %c0_17] : memref<1x12x8x128xf32, #tpu.memory_space<vmem>>, vector<1x1x8x128xf32>
    %11 = vector.shape_cast %10 : vector<1x1x8x128xf32> to vector<8x128xf32>
    %c0_18 = arith.constant 0 : index
    %c2 = arith.constant 2 : index
    %c0_19 = arith.constant 0 : index
    %c0_20 = arith.constant 0 : index
    %12 = vector.load %arg3[%c0_18, %c2, %c0_19, %c0_20] : memref<1x12x8x128xf32, #tpu.memory_space<vmem>>, vector<1x1x8x128xf32>
    %13 = vector.shape_cast %12 : vector<1x1x8x128xf32> to vector<8x128xf32>
    %c0_21 = arith.constant 0 : index
    %c6 = arith.constant 6 : index
    %c0_22 = arith.constant 0 : index
    %c0_23 = arith.constant 0 : index
    %14 = vector.load %arg3[%c0_21, %c6, %c0_22, %c0_23] : memref<1x12x8x128xf32, #tpu.memory_space<vmem>>, vector<1x1x8x128xf32>
    %15 = vector.shape_cast %14 : vector<1x1x8x128xf32> to vector<8x128xf32>
    %c0_24 = arith.constant 0 : index
    %c10 = arith.constant 10 : index
    %c0_25 = arith.constant 0 : index
    %c0_26 = arith.constant 0 : index
    %16 = vector.load %arg3[%c0_24, %c10, %c0_25, %c0_26] : memref<1x12x8x128xf32, #tpu.memory_space<vmem>>, vector<1x1x8x128xf32>
    %17 = vector.shape_cast %16 : vector<1x1x8x128xf32> to vector<8x128xf32>
    %c0_27 = arith.constant 0 : index
    %c3 = arith.constant 3 : index
    %c0_28 = arith.constant 0 : index
    %c0_29 = arith.constant 0 : index
    %18 = vector.load %arg3[%c0_27, %c3, %c0_28, %c0_29] : memref<1x12x8x128xf32, #tpu.memory_space<vmem>>, vector<1x1x8x128xf32>
    %19 = vector.shape_cast %18 : vector<1x1x8x128xf32> to vector<8x128xf32>
    %c0_30 = arith.constant 0 : index
    %c7 = arith.constant 7 : index
    %c0_31 = arith.constant 0 : index
    %c0_32 = arith.constant 0 : index
    %20 = vector.load %arg3[%c0_30, %c7, %c0_31, %c0_32] : memref<1x12x8x128xf32, #tpu.memory_space<vmem>>, vector<1x1x8x128xf32>
    %21 = vector.shape_cast %20 : vector<1x1x8x128xf32> to vector<8x128xf32>
    %c0_33 = arith.constant 0 : index
    %c11 = arith.constant 11 : index
    %c0_34 = arith.constant 0 : index
    %c0_35 = arith.constant 0 : index
    %22 = vector.load %arg3[%c0_33, %c11, %c0_34, %c0_35] : memref<1x12x8x128xf32, #tpu.memory_space<vmem>>, vector<1x1x8x128xf32>
    %23 = vector.shape_cast %22 : vector<1x1x8x128xf32> to vector<8x128xf32>
    %24 = arith.subf %13, %1 : vector<8x128xf32>
    %25 = arith.subf %15, %3 : vector<8x128xf32>
    %26 = arith.subf %17, %5 : vector<8x128xf32>
    %27 = arith.subf %7, %1 : vector<8x128xf32>
    %28 = arith.subf %9, %3 : vector<8x128xf32>
    %29 = arith.subf %11, %5 : vector<8x128xf32>
    %30 = arith.mulf %25, %29 : vector<8x128xf32>
    %31 = arith.mulf %26, %28 : vector<8x128xf32>
    %32 = arith.subf %30, %31 : vector<8x128xf32>
    %33 = arith.mulf %26, %27 : vector<8x128xf32>
    %34 = arith.mulf %24, %29 : vector<8x128xf32>
    %35 = arith.subf %33, %34 : vector<8x128xf32>
    %36 = arith.mulf %24, %28 : vector<8x128xf32>
    %37 = arith.mulf %25, %27 : vector<8x128xf32>
    %38 = arith.subf %36, %37 : vector<8x128xf32>
    %39 = arith.subf %19, %7 : vector<8x128xf32>
    %40 = arith.subf %21, %9 : vector<8x128xf32>
    %41 = arith.subf %23, %11 : vector<8x128xf32>
    %42 = arith.subf %1, %7 : vector<8x128xf32>
    %43 = arith.subf %3, %9 : vector<8x128xf32>
    %44 = arith.subf %5, %11 : vector<8x128xf32>
    %45 = arith.mulf %40, %44 : vector<8x128xf32>
    %46 = arith.mulf %41, %43 : vector<8x128xf32>
    %47 = arith.subf %45, %46 : vector<8x128xf32>
    %48 = arith.mulf %41, %42 : vector<8x128xf32>
    %49 = arith.mulf %39, %44 : vector<8x128xf32>
    %50 = arith.subf %48, %49 : vector<8x128xf32>
    %51 = arith.mulf %39, %43 : vector<8x128xf32>
    %52 = arith.mulf %40, %42 : vector<8x128xf32>
    %53 = arith.subf %51, %52 : vector<8x128xf32>
    %54 = arith.mulf %32, %32 : vector<8x128xf32>
    %55 = arith.mulf %35, %35 : vector<8x128xf32>
    %56 = arith.addf %54, %55 : vector<8x128xf32>
    %57 = arith.mulf %38, %38 : vector<8x128xf32>
    %58 = arith.addf %56, %57 : vector<8x128xf32>
    %cst = arith.constant 1.000000e-30 : f32
    %59 = vector.broadcast %cst : f32 to vector<8x128xf32>
    %60 = arith.maximumf %58, %59 : vector<8x128xf32>
    %61 = math.rsqrt %60 : vector<8x128xf32>
    %62 = arith.mulf %47, %47 : vector<8x128xf32>
    %63 = arith.mulf %50, %50 : vector<8x128xf32>
    %64 = arith.addf %62, %63 : vector<8x128xf32>
    %65 = arith.mulf %53, %53 : vector<8x128xf32>
    %66 = arith.addf %64, %65 : vector<8x128xf32>
    %cst_36 = arith.constant 1.000000e-30 : f32
    %67 = vector.broadcast %cst_36 : f32 to vector<8x128xf32>
    %68 = arith.maximumf %66, %67 : vector<8x128xf32>
    %69 = math.rsqrt %68 : vector<8x128xf32>
    %70 = arith.mulf %61, %69 : vector<8x128xf32>
    %71 = arith.mulf %32, %47 : vector<8x128xf32>
    %72 = arith.mulf %35, %50 : vector<8x128xf32>
    %73 = arith.addf %71, %72 : vector<8x128xf32>
    %74 = arith.mulf %38, %53 : vector<8x128xf32>
    %75 = arith.addf %73, %74 : vector<8x128xf32>
    %76 = arith.mulf %75, %70 : vector<8x128xf32>
    %cst_37 = arith.constant 0.000000e+00 : f32
    %77 = vector.broadcast %cst_37 : f32 to vector<8x128xf32>
    %78 = arith.subf %77, %76 : vector<8x128xf32>
    %cst_38 = arith.constant -1.000000e+00 : f32
    %cst_39 = arith.constant 1.000000e+00 : f32
    %79 = vector.broadcast %cst_38 : f32 to vector<8x128xf32>
    %80 = arith.maximumf %79, %78 : vector<8x128xf32>
    %81 = vector.broadcast %cst_39 : f32 to vector<8x128xf32>
    %82 = arith.minimumf %81, %80 : vector<8x128xf32>
    %83 = math.absf %82 : vector<8x128xf32>
    %cst_40 = arith.constant -0.0012624911 : f32
    %84 = vector.broadcast %cst_40 : f32 to vector<8x128xf32>
    %85 = arith.mulf %84, %83 : vector<8x128xf32>
    %cst_41 = arith.constant 6.670090e-03 : f32
    %86 = vector.broadcast %cst_41 : f32 to vector<8x128xf32>
    %87 = arith.addf %85, %86 : vector<8x128xf32>
    %88 = arith.mulf %87, %83 : vector<8x128xf32>
    %cst_42 = arith.constant -0.0170881264 : f32
    %89 = vector.broadcast %cst_42 : f32 to vector<8x128xf32>
    %90 = arith.addf %88, %89 : vector<8x128xf32>
    %91 = arith.mulf %90, %83 : vector<8x128xf32>
    %cst_43 = arith.constant 0.0308918804 : f32
    %92 = vector.broadcast %cst_43 : f32 to vector<8x128xf32>
    %93 = arith.addf %91, %92 : vector<8x128xf32>
    %94 = arith.mulf %93, %83 : vector<8x128xf32>
    %cst_44 = arith.constant -0.0501743034 : f32
    %95 = vector.broadcast %cst_44 : f32 to vector<8x128xf32>
    %96 = arith.addf %94, %95 : vector<8x128xf32>
    %97 = arith.mulf %96, %83 : vector<8x128xf32>
    %cst_45 = arith.constant 0.0889789909 : f32
    %98 = vector.broadcast %cst_45 : f32 to vector<8x128xf32>
    %99 = arith.addf %97, %98 : vector<8x128xf32>
    %100 = arith.mulf %99, %83 : vector<8x128xf32>
    %cst_46 = arith.constant -0.214598805 : f32
    %101 = vector.broadcast %cst_46 : f32 to vector<8x128xf32>
    %102 = arith.addf %100, %101 : vector<8x128xf32>
    %103 = arith.mulf %102, %83 : vector<8x128xf32>
    %cst_47 = arith.constant 1.57079625 : f32
    %104 = vector.broadcast %cst_47 : f32 to vector<8x128xf32>
    %105 = arith.addf %103, %104 : vector<8x128xf32>
    %cst_48 = arith.constant 1.000000e+00 : f32
    %106 = vector.broadcast %cst_48 : f32 to vector<8x128xf32>
    %107 = arith.subf %106, %83 : vector<8x128xf32>
    %cst_49 = arith.constant 0.000000e+00 : f32
    %108 = vector.broadcast %cst_49 : f32 to vector<8x128xf32>
    %109 = arith.maximumf %107, %108 : vector<8x128xf32>
    %110 = math.sqrt %109 : vector<8x128xf32>
    %111 = arith.mulf %110, %105 : vector<8x128xf32>
    %cst_50 = arith.constant 0.000000e+00 : f32
    %112 = vector.broadcast %cst_50 : f32 to vector<8x128xf32>
    %113 = arith.cmpf oge, %82, %112 : vector<8x128xf32>
    %cst_51 = arith.constant 3.14159274 : f32
    %114 = vector.broadcast %cst_51 : f32 to vector<8x128xf32>
    %115 = arith.subf %114, %111 : vector<8x128xf32>
    %116 = arith.select %113, %111, %115 : vector<8x128xi1>, vector<8x128xf32>
    %c0_52 = arith.constant 0 : index
    %c0_53 = arith.constant 0 : index
    %c0_54 = arith.constant 0 : index
    %c0_55 = arith.constant 0 : index
    %117 = vector.load %arg4[%c0_52, %c0_53, %c0_54, %c0_55] : memref<1x12x8x128xf32, #tpu.memory_space<vmem>>, vector<1x1x8x128xf32>
    %118 = vector.shape_cast %117 : vector<1x1x8x128xf32> to vector<8x128xf32>
    %c0_56 = arith.constant 0 : index
    %c4_57 = arith.constant 4 : index
    %c0_58 = arith.constant 0 : index
    %c0_59 = arith.constant 0 : index
    %119 = vector.load %arg4[%c0_56, %c4_57, %c0_58, %c0_59] : memref<1x12x8x128xf32, #tpu.memory_space<vmem>>, vector<1x1x8x128xf32>
    %120 = vector.shape_cast %119 : vector<1x1x8x128xf32> to vector<8x128xf32>
    %c0_60 = arith.constant 0 : index
    %c8_61 = arith.constant 8 : index
    %c0_62 = arith.constant 0 : index
    %c0_63 = arith.constant 0 : index
    %121 = vector.load %arg4[%c0_60, %c8_61, %c0_62, %c0_63] : memref<1x12x8x128xf32, #tpu.memory_space<vmem>>, vector<1x1x8x128xf32>
    %122 = vector.shape_cast %121 : vector<1x1x8x128xf32> to vector<8x128xf32>
    %c0_64 = arith.constant 0 : index
    %c1_65 = arith.constant 1 : index
    %c0_66 = arith.constant 0 : index
    %c0_67 = arith.constant 0 : index
    %123 = vector.load %arg4[%c0_64, %c1_65, %c0_66, %c0_67] : memref<1x12x8x128xf32, #tpu.memory_space<vmem>>, vector<1x1x8x128xf32>
    %124 = vector.shape_cast %123 : vector<1x1x8x128xf32> to vector<8x128xf32>
    %c0_68 = arith.constant 0 : index
    %c5_69 = arith.constant 5 : index
    %c0_70 = arith.constant 0 : index
    %c0_71 = arith.constant 0 : index
    %125 = vector.load %arg4[%c0_68, %c5_69, %c0_70, %c0_71] : memref<1x12x8x128xf32, #tpu.memory_space<vmem>>, vector<1x1x8x128xf32>
    %126 = vector.shape_cast %125 : vector<1x1x8x128xf32> to vector<8x128xf32>
    %c0_72 = arith.constant 0 : index
    %c9_73 = arith.constant 9 : index
    %c0_74 = arith.constant 0 : index
    %c0_75 = arith.constant 0 : index
    %127 = vector.load %arg4[%c0_72, %c9_73, %c0_74, %c0_75] : memref<1x12x8x128xf32, #tpu.memory_space<vmem>>, vector<1x1x8x128xf32>
    %128 = vector.shape_cast %127 : vector<1x1x8x128xf32> to vector<8x128xf32>
    %c0_76 = arith.constant 0 : index
    %c2_77 = arith.constant 2 : index
    %c0_78 = arith.constant 0 : index
    %c0_79 = arith.constant 0 : index
    %129 = vector.load %arg4[%c0_76, %c2_77, %c0_78, %c0_79] : memref<1x12x8x128xf32, #tpu.memory_space<vmem>>, vector<1x1x8x128xf32>
    %130 = vector.shape_cast %129 : vector<1x1x8x128xf32> to vector<8x128xf32>
    %c0_80 = arith.constant 0 : index
    %c6_81 = arith.constant 6 : index
    %c0_82 = arith.constant 0 : index
    %c0_83 = arith.constant 0 : index
    %131 = vector.load %arg4[%c0_80, %c6_81, %c0_82, %c0_83] : memref<1x12x8x128xf32, #tpu.memory_space<vmem>>, vector<1x1x8x128xf32>
    %132 = vector.shape_cast %131 : vector<1x1x8x128xf32> to vector<8x128xf32>
    %c0_84 = arith.constant 0 : index
    %c10_85 = arith.constant 10 : index
    %c0_86 = arith.constant 0 : index
    %c0_87 = arith.constant 0 : index
    %133 = vector.load %arg4[%c0_84, %c10_85, %c0_86, %c0_87] : memref<1x12x8x128xf32, #tpu.memory_space<vmem>>, vector<1x1x8x128xf32>
    %134 = vector.shape_cast %133 : vector<1x1x8x128xf32> to vector<8x128xf32>
    %c0_88 = arith.constant 0 : index
    %c3_89 = arith.constant 3 : index
    %c0_90 = arith.constant 0 : index
    %c0_91 = arith.constant 0 : index
    %135 = vector.load %arg4[%c0_88, %c3_89, %c0_90, %c0_91] : memref<1x12x8x128xf32, #tpu.memory_space<vmem>>, vector<1x1x8x128xf32>
    %136 = vector.shape_cast %135 : vector<1x1x8x128xf32> to vector<8x128xf32>
    %c0_92 = arith.constant 0 : index
    %c7_93 = arith.constant 7 : index
    %c0_94 = arith.constant 0 : index
    %c0_95 = arith.constant 0 : index
    %137 = vector.load %arg4[%c0_92, %c7_93, %c0_94, %c0_95] : memref<1x12x8x128xf32, #tpu.memory_space<vmem>>, vector<1x1x8x128xf32>
    %138 = vector.shape_cast %137 : vector<1x1x8x128xf32> to vector<8x128xf32>
    %c0_96 = arith.constant 0 : index
    %c11_97 = arith.constant 11 : index
    %c0_98 = arith.constant 0 : index
    %c0_99 = arith.constant 0 : index
    %139 = vector.load %arg4[%c0_96, %c11_97, %c0_98, %c0_99] : memref<1x12x8x128xf32, #tpu.memory_space<vmem>>, vector<1x1x8x128xf32>
    %140 = vector.shape_cast %139 : vector<1x1x8x128xf32> to vector<8x128xf32>
    %141 = arith.subf %130, %118 : vector<8x128xf32>
    %142 = arith.subf %132, %120 : vector<8x128xf32>
    %143 = arith.subf %134, %122 : vector<8x128xf32>
    %144 = arith.subf %124, %118 : vector<8x128xf32>
    %145 = arith.subf %126, %120 : vector<8x128xf32>
    %146 = arith.subf %128, %122 : vector<8x128xf32>
    %147 = arith.mulf %142, %146 : vector<8x128xf32>
    %148 = arith.mulf %143, %145 : vector<8x128xf32>
    %149 = arith.subf %147, %148 : vector<8x128xf32>
    %150 = arith.mulf %143, %144 : vector<8x128xf32>
    %151 = arith.mulf %141, %146 : vector<8x128xf32>
    %152 = arith.subf %150, %151 : vector<8x128xf32>
    %153 = arith.mulf %141, %145 : vector<8x128xf32>
    %154 = arith.mulf %142, %144 : vector<8x128xf32>
    %155 = arith.subf %153, %154 : vector<8x128xf32>
    %156 = arith.subf %136, %124 : vector<8x128xf32>
    %157 = arith.subf %138, %126 : vector<8x128xf32>
    %158 = arith.subf %140, %128 : vector<8x128xf32>
    %159 = arith.subf %118, %124 : vector<8x128xf32>
    %160 = arith.subf %120, %126 : vector<8x128xf32>
    %161 = arith.subf %122, %128 : vector<8x128xf32>
    %162 = arith.mulf %157, %161 : vector<8x128xf32>
    %163 = arith.mulf %158, %160 : vector<8x128xf32>
    %164 = arith.subf %162, %163 : vector<8x128xf32>
    %165 = arith.mulf %158, %159 : vector<8x128xf32>
    %166 = arith.mulf %156, %161 : vector<8x128xf32>
    %167 = arith.subf %165, %166 : vector<8x128xf32>
    %168 = arith.mulf %156, %160 : vector<8x128xf32>
    %169 = arith.mulf %157, %159 : vector<8x128xf32>
    %170 = arith.subf %168, %169 : vector<8x128xf32>
    %171 = arith.mulf %149, %149 : vector<8x128xf32>
    %172 = arith.mulf %152, %152 : vector<8x128xf32>
    %173 = arith.addf %171, %172 : vector<8x128xf32>
    %174 = arith.mulf %155, %155 : vector<8x128xf32>
    %175 = arith.addf %173, %174 : vector<8x128xf32>
    %cst_100 = arith.constant 1.000000e-30 : f32
    %176 = vector.broadcast %cst_100 : f32 to vector<8x128xf32>
    %177 = arith.maximumf %175, %176 : vector<8x128xf32>
    %178 = math.rsqrt %177 : vector<8x128xf32>
    %179 = arith.mulf %164, %164 : vector<8x128xf32>
    %180 = arith.mulf %167, %167 : vector<8x128xf32>
    %181 = arith.addf %179, %180 : vector<8x128xf32>
    %182 = arith.mulf %170, %170 : vector<8x128xf32>
    %183 = arith.addf %181, %182 : vector<8x128xf32>
    %cst_101 = arith.constant 1.000000e-30 : f32
    %184 = vector.broadcast %cst_101 : f32 to vector<8x128xf32>
    %185 = arith.maximumf %183, %184 : vector<8x128xf32>
    %186 = math.rsqrt %185 : vector<8x128xf32>
    %187 = arith.mulf %178, %186 : vector<8x128xf32>
    %188 = arith.mulf %149, %164 : vector<8x128xf32>
    %189 = arith.mulf %152, %167 : vector<8x128xf32>
    %190 = arith.addf %188, %189 : vector<8x128xf32>
    %191 = arith.mulf %155, %170 : vector<8x128xf32>
    %192 = arith.addf %190, %191 : vector<8x128xf32>
    %193 = arith.mulf %192, %187 : vector<8x128xf32>
    %cst_102 = arith.constant 0.000000e+00 : f32
    %194 = vector.broadcast %cst_102 : f32 to vector<8x128xf32>
    %195 = arith.subf %194, %193 : vector<8x128xf32>
    %cst_103 = arith.constant -1.000000e+00 : f32
    %cst_104 = arith.constant 1.000000e+00 : f32
    %196 = vector.broadcast %cst_103 : f32 to vector<8x128xf32>
    %197 = arith.maximumf %196, %195 : vector<8x128xf32>
    %198 = vector.broadcast %cst_104 : f32 to vector<8x128xf32>
    %199 = arith.minimumf %198, %197 : vector<8x128xf32>
    %200 = math.absf %199 : vector<8x128xf32>
    %cst_105 = arith.constant -0.0012624911 : f32
    %201 = vector.broadcast %cst_105 : f32 to vector<8x128xf32>
    %202 = arith.mulf %201, %200 : vector<8x128xf32>
    %cst_106 = arith.constant 6.670090e-03 : f32
    %203 = vector.broadcast %cst_106 : f32 to vector<8x128xf32>
    %204 = arith.addf %202, %203 : vector<8x128xf32>
    %205 = arith.mulf %204, %200 : vector<8x128xf32>
    %cst_107 = arith.constant -0.0170881264 : f32
    %206 = vector.broadcast %cst_107 : f32 to vector<8x128xf32>
    %207 = arith.addf %205, %206 : vector<8x128xf32>
    %208 = arith.mulf %207, %200 : vector<8x128xf32>
    %cst_108 = arith.constant 0.0308918804 : f32
    %209 = vector.broadcast %cst_108 : f32 to vector<8x128xf32>
    %210 = arith.addf %208, %209 : vector<8x128xf32>
    %211 = arith.mulf %210, %200 : vector<8x128xf32>
    %cst_109 = arith.constant -0.0501743034 : f32
    %212 = vector.broadcast %cst_109 : f32 to vector<8x128xf32>
    %213 = arith.addf %211, %212 : vector<8x128xf32>
    %214 = arith.mulf %213, %200 : vector<8x128xf32>
    %cst_110 = arith.constant 0.0889789909 : f32
    %215 = vector.broadcast %cst_110 : f32 to vector<8x128xf32>
    %216 = arith.addf %214, %215 : vector<8x128xf32>
    %217 = arith.mulf %216, %200 : vector<8x128xf32>
    %cst_111 = arith.constant -0.214598805 : f32
    %218 = vector.broadcast %cst_111 : f32 to vector<8x128xf32>
    %219 = arith.addf %217, %218 : vector<8x128xf32>
    %220 = arith.mulf %219, %200 : vector<8x128xf32>
    %cst_112 = arith.constant 1.57079625 : f32
    %221 = vector.broadcast %cst_112 : f32 to vector<8x128xf32>
    %222 = arith.addf %220, %221 : vector<8x128xf32>
    %cst_113 = arith.constant 1.000000e+00 : f32
    %223 = vector.broadcast %cst_113 : f32 to vector<8x128xf32>
    %224 = arith.subf %223, %200 : vector<8x128xf32>
    %cst_114 = arith.constant 0.000000e+00 : f32
    %225 = vector.broadcast %cst_114 : f32 to vector<8x128xf32>
    %226 = arith.maximumf %224, %225 : vector<8x128xf32>
    %227 = math.sqrt %226 : vector<8x128xf32>
    %228 = arith.mulf %227, %222 : vector<8x128xf32>
    %cst_115 = arith.constant 0.000000e+00 : f32
    %229 = vector.broadcast %cst_115 : f32 to vector<8x128xf32>
    %230 = arith.cmpf oge, %199, %229 : vector<8x128xf32>
    %cst_116 = arith.constant 3.14159274 : f32
    %231 = vector.broadcast %cst_116 : f32 to vector<8x128xf32>
    %232 = arith.subf %231, %228 : vector<8x128xf32>
    %233 = arith.select %230, %228, %232 : vector<8x128xi1>, vector<8x128xf32>
    %234 = arith.subf %116, %233 : vector<8x128xf32>
    %235 = arith.mulf %234, %234 : vector<8x128xf32>
    %c0_i32 = arith.constant 0 : i32
    %236 = arith.cmpi eq, %arg2, %c0_i32 : i32
    %237 = arith.extui %236 : i1 to i32
    %c0_i32_117 = arith.constant 0 : i32
    %238 = arith.cmpi ne, %237, %c0_i32_117 : i32
    scf.if %238 {
      %cst_125 = arith.constant 0.000000e+00 : f32
      %247 = vector.broadcast %cst_125 : f32 to vector<8x128xf32>
      %c0_126 = arith.constant 0 : index
      %c0_127 = arith.constant 0 : index
      %248 = vector.load %arg6[%c0_126, %c0_127] : memref<8x128xf32, #tpu.memory_space<vmem>>, vector<8x128xf32>
      tpu.vector_store %arg6[%c0_126, %c0_127], %247 {strides = array<i32>} : memref<8x128xf32, #tpu.memory_space<vmem>>, vector<8x128xf32>,
    } else {
    }
    %c0_118 = arith.constant 0 : index
    %c0_119 = arith.constant 0 : index
    %239 = vector.load %arg6[%c0_118, %c0_119] : memref<8x128xf32, #tpu.memory_space<vmem>>, vector<8x128xf32>
    %240 = vector.shape_cast %235 : vector<8x128xf32> to vector<1x8x128xf32>
    %cst_120 = arith.constant dense<0.000000e+00> : vector<8x128xf32>
    %241 = vector.multi_reduction <add>, %240, %cst_120 [0] : vector<1x8x128xf32> to vector<8x128xf32>
    %242 = arith.addf %239, %241 : vector<8x128xf32>
    %c0_121 = arith.constant 0 : index
    %c0_122 = arith.constant 0 : index
    %243 = vector.load %arg6[%c0_121, %c0_122] : memref<8x128xf32, #tpu.memory_space<vmem>>, vector<8x128xf32>
    tpu.vector_store %arg6[%c0_121, %c0_122], %242 {strides = array<i32>} : memref<8x128xf32, #tpu.memory_space<vmem>>, vector<8x128xf32>,
    %c0_i32_123 = arith.constant 0 : i32
    %244 = arith.cmpi eq, %arg2, %c0_i32_123 : i32
    %245 = arith.extui %244 : i1 to i32
    %c0_i32_124 = arith.constant 0 : i32
    %246 = arith.cmpi ne, %245, %c0_i32_124 : i32
    scf.if %246 {
      %c0_125 = arith.constant 0 : index
      %c0_126 = arith.constant 0 : index
      %247 = vector.load %arg6[%c0_125, %c0_126] : memref<8x128xf32, #tpu.memory_space<vmem>>, vector<8x128xf32>
      %248 = vector.shape_cast %247 : vector<8x128xf32> to vector<1x8x128xf32>
      %cst_127 = arith.constant dense<0.000000e+00> : vector<1xf32>
      %249 = vector.multi_reduction <add>, %248, %cst_127 [1, 2] : vector<1x8x128xf32> to vector<1xf32>
      %250 = vector.shape_cast %249 : vector<1xf32> to vector<1x1x1xf32>
      %251 = vector.extract %250[0, 0, 0] : f32 from vector<1x1x1xf32>
      %252 = vector.broadcast %251 : f32 to vector<1x1xf32>
      %c0_128 = arith.constant 0 : index
      %c0_129 = arith.constant 0 : index
      %c0_130 = arith.constant 0 : index
      %c0_131 = arith.constant 0 : index
      %253 = vector.load %arg5[%c0_128, %c0_129, %c0_130, %c0_131] : memref<1x1x1x1xf32, #tpu.memory_space<vmem>>, vector<1x1x1x1xf32>
      %254 = vector.shape_cast %253 : vector<1x1x1x1xf32> to vector<1x1xf32>
      %255 = vector.shape_cast %252 : vector<1x1xf32> to vector<1x1x1x1xf32>
      tpu.vector_store %arg5[%c0_128, %c0_129, %c0_130, %c0_131], %255 {strides = array<i32>} : memref<1x1x1x1xf32, #tpu.memory_space<vmem>>, vector<1x1x1x1xf32>,
    } else {
    }
    return
  }
  func.func @transform_0(%arg0: i32, %arg1: i32, %arg2: i32) -> (i32, i32, i32, i32) {
    %c1_i32 = arith.constant 1 : i32
    %0 = arith.muli %arg1, %c1_i32 : i32
    %1 = arith.addi %0, %arg2 : i32
    %c0_i32 = arith.constant 0 : i32
    %c0_i32_0 = arith.constant 0 : i32
    %c0_i32_1 = arith.constant 0 : i32
    return %arg0, %c0_i32, %1, %c0_i32_0 : i32, i32, i32, i32
  }
  func.func @transform_1(%arg0: i32, %arg1: i32, %arg2: i32) -> (i32, i32, i32, i32) {
    %c1_i32 = arith.constant 1 : i32
    %0 = arith.muli %arg1, %c1_i32 : i32
    %1 = arith.addi %0, %arg2 : i32
    %c0_i32 = arith.constant 0 : i32
    %c0_i32_0 = arith.constant 0 : i32
    %c0_i32_1 = arith.constant 0 : i32
    return %arg0, %c0_i32, %1, %c0_i32_0 : i32, i32, i32, i32
  }
  func.func @transform_2(%arg0: i32, %arg1: i32, %arg2: i32) -> (i32, i32, i32, i32) {
    %c0_i32 = arith.constant 0 : i32
    %c0_i32_0 = arith.constant 0 : i32
    %c0_i32_1 = arith.constant 0 : i32
    return %arg0, %arg1, %c0_i32, %c0_i32_0 : i32, i32, i32, i32
  }
}

</mosaic_0001>

<llo_original>
// kernel: mesh_dihedral_angle_loss.1
$region0: #{mesh_dihedral_angle_loss.1}
  #allocation0 [shape = 'u32[]', space=smem, size = 0x4, offset = 0x4, fixed_abs, tag = 'smem constant byte address 0x4 - core index']
  #allocation1 [shape = 'u32[144,128]{1,0:T(1,128)}', space=vmem, size = 0x12000, scoped, tag = 'internal scratch']
  #allocation2 [shape = 'f32[8,128]{1,0:T(8,128)}', space=vmem, size = 0x1000, scoped, tag = 'scratch operand']
  %s0 = inlined_call_operand.vmem [shape: f32[2,12,8,128], index: 0, kind: input, shape index: {}]
  %s1 = inlined_call_operand.vmem [shape: f32[2,12,8,128], index: 1, kind: input, shape index: {}]
  %s2 = inlined_call_operand.vmem [shape: f32[2,1,1,1], index: 2, kind: output, shape index: {}]
  %s3 = sld [smem:[#allocation0]]
  $region49: #{mesh_dihedral_angle_loss.1} parent=0
    _
  %s5 = ssub.s32 1, %s3
  %s6 = scalar_select 0, %s5, %s3
  loop: start=0, step=1, limit=4
  $region2: #{mesh_dihedral_angle_loss.1} parent=0 // loop_pre_header
    _
  $region3: #{mesh_dihedral_angle_loss.1} parent=0 // loop_header
    %s8 = sphi 0, %s12
    %p9 = scmp.ge.s32.totalorder %s8, 4
    %s15 = sphi 0, %s34
    %s16 = sphi 0, %s30
    %s17 = sphi 0, %s26
    %s18 = sphi 0, %s15
    %s19 = sphi 0, %s16
    %s20 = sphi 0, %s17
    %s21 = sphi 0, %s18
    %s22 = sphi 0, %s19
    %s23 = sphi 0, %s20
    %s41 = sphi 0, %s43
    %s44 = sphi 0, %s41
    %s45 = sphi 0, %s44
    %s61 = sphi 0, %s45
    %s71 = sphi 0, %s73
    %s74 = sphi 0, %s71
    %s75 = sphi 0, %s74
    %s91 = sphi 0, %s75
    %s99 = sphi 0, %s101
    %s102 = sphi 0, %s99
    %s103 = sphi 0, %s102
    %s119 = sphi 0, %s103
  $region4: #{mesh_dihedral_angle_loss.1} parent=0 // loop_header_branch
    %11 = sbr.rel (%p9) target = $region8
  $region5: #{mesh_dihedral_angle_loss.1} parent=0 // loop_body
    %s13 = ssub.s32 %s8, 1
    %s14 = ssub.s32 %s8, 2
    %s24 = sadd.s32 1, %s17
    %p25 = scmp.ge.s32.totalorder %s24, 1
    %s26 = scalar_select %p25, 0, %s24
    %s27 = sadd.s32 1, %s16
    %s28 = scalar_select %p25, %s27, %s16
    %p29 = scmp.ge.s32.totalorder %s28, 1
    %s30 = scalar_select %p29, 0, %s28
    %s31 = sadd.s32 1, %s15
    %s32 = scalar_select %p29, %s31, %s15
    %p33 = scmp.ge.s32.totalorder %s32, 2
    %s34 = scalar_select %p33, 0, %s32
    %s35 = sadd.s32 %s16, %s17
    %s36 = sadd.s32 %s30, %s26
    %s37 = ssub.s32 %s15, %s34
    %s38 = ssub.s32 %s35, %s36
    %s39 = sor.u32 %s37, %s38
    %p40 = scmp.eq.s32.totalorder %s39, 0
    %s42 = sadd.s32 %s41, 1
    %s43 = scalar_select %p40, %s41, %s42
    %p46 = pneg %p40
    %p47 = scmp.eq.s32.totalorder %s8, 1
    %p48 = por %p46, %p47
    %p49 = scmp.ne.s32.totalorder %s41, %s44
    %p50 = scmp.eq.s32.totalorder %s8, 0
    %p51 = por %p49, %p50
    %p52 = scmp.ne.s32.totalorder %s41, %s44
    %p53 = scmp.eq.s32.totalorder %s13, 1
    %p54 = por %p52, %p53
    %p55 = scmp.ne.s32.totalorder %s44, %s45
    %p56 = scmp.eq.s32.totalorder %s13, 0
    %p57 = por %p55, %p56
    %p58 = scmp.ne.s32.totalorder %s44, %s45
    %p59 = scmp.eq.s32.totalorder %s14, 1
    %p60 = por %p58, %p59
    %p62 = scmp.ne.s32.totalorder %s45, %s61
    %p63 = scmp.eq.s32.totalorder %s14, 0
    %p64 = por %p62, %p63
    %s65 = sadd.s32 %s16, %s17
    %s66 = sadd.s32 %s30, %s26
    %s67 = ssub.s32 %s15, %s34
    %s68 = ssub.s32 %s65, %s66
    %s69 = sor.u32 %s67, %s68
    %p70 = scmp.eq.s32.totalorder %s69, 0
    %s72 = sadd.s32 %s71, 1
    %s73 = scalar_select %p70, %s71, %s72
    %p76 = pneg %p70
    %p77 = scmp.eq.s32.totalorder %s8, 1
    %p78 = por %p76, %p77
    %p79 = scmp.ne.s32.totalorder %s71, %s74
    %p80 = scmp.eq.s32.totalorder %s8, 0
    %p81 = por %p79, %p80
    %p82 = scmp.ne.s32.totalorder %s71, %s74
    %p83 = scmp.eq.s32.totalorder %s13, 1
    %p84 = por %p82, %p83
    %p85 = scmp.ne.s32.totalorder %s74, %s75
    %p86 = scmp.eq.s32.totalorder %s13, 0
    %p87 = por %p85, %p86
    %p88 = scmp.ne.s32.totalorder %s74, %s75
    %p89 = scmp.eq.s32.totalorder %s14, 1
    %p90 = por %p88, %p89
    %p92 = scmp.ne.s32.totalorder %s75, %s91
    %p93 = scmp.eq.s32.totalorder %s14, 0
    %p94 = por %p92, %p93
    %s95 = ssub.s32 %s15, %s34
    %s96 = ssub.s32 %s16, %s30
    %s97 = sor.u32 %s95, %s96
    %p98 = scmp.eq.s32.totalorder %s97, 0
    %s100 = sadd.s32 %s99, 1
    %s101 = scalar_select %p98, %s99, %s100
    %p104 = pneg %p98
    %p105 = scmp.eq.s32.totalorder %s8, 1
    %p106 = por %p104, %p105
    %p107 = scmp.ne.s32.totalorder %s99, %s102
    %p108 = scmp.eq.s32.totalorder %s8, 0
    %p109 = por %p107, %p108
    %p110 = scmp.ne.s32.totalorder %s99, %s102
    %p111 = scmp.eq.s32.totalorder %s13, 1
    %p112 = por %p110, %p111
    %p113 = scmp.ne.s32.totalorder %s102, %s103
    %p114 = scmp.eq.s32.totalorder %s13, 0
    %p115 = por %p113, %p114
    %p116 = scmp.ne.s32.totalorder %s102, %s103
    %p117 = scmp.eq.s32.totalorder %s14, 1
    %p118 = por %p116, %p117
    %p120 = scmp.ne.s32.totalorder %s103, %s119
    %p121 = scmp.eq.s32.totalorder %s14, 0
    %p122 = por %p120, %p121
    %p123 = scmp.le.s32.totalorder 1, %s8
    %p124 = scmp.lt.s32.totalorder %s8, 3
    %p125 = pnand %p123, %p124
    %p126 = pneg %p125
    // Predicated region
    $region9: #{mesh_dihedral_angle_loss.1} parent=5 // pred_check
      _
    $region10: #{mesh_dihedral_angle_loss.1} parent=5 // pred_check_branch
      %128 = sbr.rel (%p125) target = $region12
    $region11: #{mesh_dihedral_angle_loss.1} parent=5 // pred_region
      %s129 = ssub.s32 %s8, 1
    $region12: #{mesh_dihedral_angle_loss.1} parent=5 // pred_fallthru
      _
    %p130 = scmp.lt.s32.totalorder %s8, 2
    // Predicated region
    $region13: #{mesh_dihedral_angle_loss.1} parent=5 // pred_check
      %p131 = pneg %p130
    $region14: #{mesh_dihedral_angle_loss.1} parent=5 // pred_check_branch
      %133 = sbr.rel (%p131) target = $region16
    $region15: #{mesh_dihedral_angle_loss.1} parent=5 // pred_region
      // Predicated region
      $region17: #{mesh_dihedral_angle_loss.1} parent=15 // pred_check
        %p134 = pneg %p51
      $region18: #{mesh_dihedral_angle_loss.1} parent=15 // pred_check_branch
        %136 = sbr.rel (%p134) target = $region20
      $region19: #{mesh_dihedral_angle_loss.1} parent=15 // pred_region
        %s137 = sadd.s32 %s16, %s17
        %p138 = scmp.lt.s32.totalorder %s15, 1
        %s139 = scalar_select %p138, %s15, 1
        %p140 = scmp.lt.s32.totalorder %s137, 0
        %s141 = scalar_select %p140, %s137, 0
        %s142 = smul.addr %s139, 12
        %s143 = sadd.s32 %s141, %s142
        %s144 = smul.addr %s143, 8
        %s145 = scalar_lea.vmem %s0, %s144
        %s146 = sadd.s32 %s16, %s17
      $region20: #{mesh_dihedral_angle_loss.1} parent=15 // pred_fallthru
        _
      // Predicated region
      $region21: #{mesh_dihedral_angle_loss.1} parent=15 // pred_check
        %p147 = pneg %p81
      $region22: #{mesh_dihedral_angle_loss.1} parent=15 // pred_check_branch
        %149 = sbr.rel (%p147) target = $region24
      $region23: #{mesh_dihedral_angle_loss.1} parent=15 // pred_region
        %s150 = sadd.s32 %s16, %s17
        %p151 = scmp.lt.s32.totalorder %s15, 1
        %s152 = scalar_select %p151, %s15, 1
        %p153 = scmp.lt.s32.totalorder %s150, 0
        %s154 = scalar_select %p153, %s150, 0
        %s155 = smul.addr %s152, 12
        %s156 = sadd.s32 %s154, %s155
        %s157 = smul.addr %s156, 8
        %s158 = scalar_lea.vmem %s1, %s157
        %s159 = sadd.s32 %s16, %s17
      $region24: #{mesh_dihedral_angle_loss.1} parent=15 // pred_fallthru
        _
    $region16: #{mesh_dihedral_angle_loss.1} parent=5 // pred_fallthru
      _
    %p160 = scmp.le.s32.totalorder 1, %s8
    %p161 = scmp.lt.s32.totalorder %s8, 3
    %p162 = pnand %p160, %p161
    %p163 = pneg %p162
    // Predicated region
    $region25: #{mesh_dihedral_angle_loss.1} parent=5 // pred_check
      _
    $region26: #{mesh_dihedral_angle_loss.1} parent=5 // pred_check_branch
      %165 = sbr.rel (%p162) target = $region28
    $region27: #{mesh_dihedral_angle_loss.1} parent=5 // pred_region
      %s166 = ssub.s32 %s8, 1
      %s167 = sadd.s32 %s19, %s20
      %p168 = scmp.lt.s32.totalorder %s18, 1
      %s169 = scalar_select %p168, %s18, 1
      %p170 = scmp.lt.s32.totalorder %s167, 0
      %s171 = scalar_select %p170, %s167, 0
      %s172 = smul.addr %s169, 12
      %s173 = sadd.s32 %s171, %s172
      %s174 = smul.addr %s173, 8
      %s175 = scalar_lea.vmem %s0, %s174
      %p176 = pneg %p57
      %p177 = pneg %p54
      %s178 = sadd.s32 %s19, %s20
      %p179 = scmp.lt.s32.totalorder %s18, 1
      %s180 = scalar_select %p179, %s18, 1
      %p181 = scmp.lt.s32.totalorder %s178, 0
      %s182 = scalar_select %p181, %s178, 0
      %s183 = smul.addr %s180, 12
      %s184 = sadd.s32 %s182, %s183
      %s185 = smul.addr %s184, 8
      %s186 = scalar_lea.vmem %s1, %s185
      %p187 = pneg %p87
      %p188 = pneg %p84
      %p189 = pneg %p115
      %p190 = pneg %p112
      %p191 = scmp.lt.s32.totalorder %s18, 1
      %s192 = scalar_select %p191, %s18, 1
      %p193 = scmp.lt.s32.totalorder %s19, 0
      %s194 = scalar_select %p193, %s19, 0
      %s195 = sadd.s32 %s194, %s192
      %s196 = scalar_lea.vmem %s2, %s195
      %s197 = sadd.s32 %s19, %s20
      %p198 = scmp.lt.s32.totalorder %s18, 1
      %s199 = scalar_select %p198, %s18, 1
      %p200 = scmp.lt.s32.totalorder %s197, 0
      %s201 = scalar_select %p200, %s197, 0
      %s202 = smul.addr %s199, 12
      %s203 = sadd.s32 %s201, %s202
      %s204 = smul.addr %s203, 8
      %s205 = scalar_lea.vmem %s0, %s204
      %s206 = sadd.s32 %s19, %s20
      %s207 = sadd.s32 %s19, %s20
      %p208 = scmp.lt.s32.totalorder %s18, 1
      %s209 = scalar_select %p208, %s18, 1
      %p210 = scmp.lt.s32.totalorder %s207, 0
      %s211 = scalar_select %p210, %s207, 0
      %s212 = smul.addr %s209, 12
      %s213 = sadd.s32 %s211, %s212
      %s214 = smul.addr %s213, 8
      %s215 = scalar_lea.vmem %s1, %s214
      %s216 = sadd.s32 %s19, %s20
      %p217 = scmp.lt.s32.totalorder %s18, 1
      %s218 = scalar_select %p217, %s18, 1
      %p219 = scmp.lt.s32.totalorder %s19, 0
      %s220 = scalar_select %p219, %s19, 0
      %s221 = sadd.s32 %s220, %s218
      %s222 = scalar_lea.vmem %s2, %s221
      %v223 = vld [vmem:[%s205] sm:$0xff]
      %s224 = scalar_lea.vmem %s205, 32
      %v225 = vld [vmem:[%s224] sm:$0xff]
      %s226 = scalar_lea.vmem %s205, 64
      %v227 = vld [vmem:[%s226] sm:$0xff]
      %s228 = scalar_lea.vmem %s205, 8
      %v229 = vld [vmem:[%s228] sm:$0xff]
      %s230 = scalar_lea.vmem %s205, 40
      %v231 = vld [vmem:[%s230] sm:$0xff]
      %s232 = scalar_lea.vmem %s205, 72
      %v233 = vld [vmem:[%s232] sm:$0xff]
      %s234 = scalar_lea.vmem %s205, 16
      %v235 = vld [vmem:[%s234] sm:$0xff]
      %s236 = scalar_lea.vmem %s205, 48
      %v237 = vld [vmem:[%s236] sm:$0xff]
      %s238 = scalar_lea.vmem %s205, 80
      %v239 = vld [vmem:[%s238] sm:$0xff]
      %s240 = scalar_lea.vmem %s205, 24
      %v241 = vld [vmem:[%s240] sm:$0xff]
      %s242 = scalar_lea.vmem %s205, 56
      %v243 = vld [vmem:[%s242] sm:$0xff]
      %s244 = scalar_lea.vmem %s205, 88
      %v245 = vld [vmem:[%s244] sm:$0xff]
      %v246 = vsub.f32 %v235, %v223
      %v247 = vsub.f32 %v237, %v225
      %v248 = vsub.f32 %v239, %v227
      %v249 = vsub.f32 %v229, %v223
      %v250 = vsub.f32 %v231, %v225
      %v251 = vsub.f32 %v233, %v227
      %v252 = vmul.f32 %v247, %v251
      %v253 = vmul.f32 %v248, %v250
      %v254 = vsub.f32 %v252, %v253
      %v255 = vmul.f32 %v248, %v249
      %v256 = vmul.f32 %v246, %v251
      %v257 = vsub.f32 %v255, %v256
      %v258 = vmul.f32 %v246, %v250
      %v259 = vmul.f32 %v247, %v249
      %v260 = vsub.f32 %v258, %v259
      %v261 = vsub.f32 %v241, %v229
      %v262 = vsub.f32 %v243, %v231
      %v263 = vsub.f32 %v245, %v233
      %v264 = vsub.f32 %v223, %v229
      %v265 = vsub.f32 %v225, %v231
      %v266 = vsub.f32 %v227, %v233
      %v267 = vmul.f32 %v262, %v266
      %v268 = vmul.f32 %v263, %v265
      %v269 = vsub.f32 %v267, %v268
      %v270 = vmul.f32 %v263, %v264
      %v271 = vmul.f32 %v261, %v266
      %v272 = vsub.f32 %v270, %v271
      %v273 = vmul.f32 %v261, %v265
      %v274 = vmul.f32 %v262, %v264
      %v275 = vsub.f32 %v273, %v274
      %v276 = vmul.f32 %v254, %v254
      %v277 = vmul.f32 %v257, %v257
      %v278 = vadd.f32 %v276, %v277
      %v279 = vmul.f32 %v260, %v260
      %v280 = vadd.f32 %v278, %v279
      %v281 = vmax.f32 %v280, 1e-30
      %v282 = vrsqrt.pop %v281
      %v283 = vmul.f32 %v269, %v269
      %v284 = vmul.f32 %v272, %v272
      %v285 = vadd.f32 %v283, %v284
      %v286 = vmul.f32 %v275, %v275
      %v287 = vadd.f32 %v285, %v286
      %v288 = vmax.f32 %v287, 1e-30
      %v289 = vrsqrt.pop %v288
      %v290 = vmul.f32 %v282, %v289
      %v291 = vmul.f32 %v254, %v269
      %v292 = vmul.f32 %v257, %v272
      %v293 = vadd.f32 %v291, %v292
      %v294 = vmul.f32 %v260, %v275
      %v295 = vadd.f32 %v293, %v294
      %v296 = vmul.f32 %v295, %v290
      %v297 = vsub.f32 0.0, %v296
      %v298 = vmax.f32 %v297, -1.0
      %v299 = vmin.f32 %v298, 1.0
      %v300 = vand.u32 2147483647, %v299
      %v301 = vmul.f32 %v300, -0.0012624911
      %v302 = vadd.f32 %v301, 0.00667009
      %v303 = vmul.f32 %v302, %v300
      %v304 = vadd.f32 %v303, -0.017088126
      %v305 = vmul.f32 %v304, %v300
      %v306 = vadd.f32 %v305, 0.03089188
      %v307 = vmul.f32 %v306, %v300
      %v308 = vadd.f32 %v307, -0.050174303
      %v309 = vmul.f32 %v308, %v300
      %v310 = vadd.f32 %v309, 0.08897899
      %v311 = vmul.f32 %v310, %v300
      %v312 = vadd.f32 %v311, -0.2145988
      %v313 = vmul.f32 %v312, %v300
      %v314 = vadd.f32 %v313, 1.5707963
      %v315 = vsub.f32 1.0, %v300
      %v316 = vmax.f32 %v315, 0.0
      %v317 = vrsqrt.pop %v316
      %v318 = vmul.f32 %v316, %v317
      %vm319 = vcmp.eq.f32.partialorder %v316, inf
      %v320 = vsel %vm319, %v316, %v318
      %vm321 = vcmp.eq.f32.partialorder %v316, 0.0
      %v322 = vand.u32 %v316, 2147483648
      %v323 = vsel %vm321, %v322, %v320
      %v324 = vmul.f32 %v323, %v314
      %vm325 = vcmp.ge.f32.partialorder %v299, 0.0
      %v326 = vsub.f32 3.1415927, %v324
      %v327 = vsel %vm325, %v324, %v326
      %v328 = vld [vmem:[%s215] sm:$0xff]
      %s329 = scalar_lea.vmem %s215, 32
      %v330 = vld [vmem:[%s329] sm:$0xff]
      %s331 = scalar_lea.vmem %s215, 64
      %v332 = vld [vmem:[%s331] sm:$0xff]
      %s333 = scalar_lea.vmem %s215, 8
      %v334 = vld [vmem:[%s333] sm:$0xff]
      %s335 = scalar_lea.vmem %s215, 40
      %v336 = vld [vmem:[%s335] sm:$0xff]
      %s337 = scalar_lea.vmem %s215, 72
      %v338 = vld [vmem:[%s337] sm:$0xff]
      %s339 = scalar_lea.vmem %s215, 16
      %v340 = vld [vmem:[%s339] sm:$0xff]
      %s341 = scalar_lea.vmem %s215, 48
      %v342 = vld [vmem:[%s341] sm:$0xff]
      %s343 = scalar_lea.vmem %s215, 80
      %v344 = vld [vmem:[%s343] sm:$0xff]
      %s345 = scalar_lea.vmem %s215, 24
      %v346 = vld [vmem:[%s345] sm:$0xff]
      %s347 = scalar_lea.vmem %s215, 56
      %v348 = vld [vmem:[%s347] sm:$0xff]
      %s349 = scalar_lea.vmem %s215, 88
      %v350 = vld [vmem:[%s349] sm:$0xff]
      %v351 = vsub.f32 %v340, %v328
      %v352 = vsub.f32 %v342, %v330
      %v353 = vsub.f32 %v344, %v332
      %v354 = vsub.f32 %v334, %v328
      %v355 = vsub.f32 %v336, %v330
      %v356 = vsub.f32 %v338, %v332
      %v357 = vmul.f32 %v352, %v356
      %v358 = vmul.f32 %v353, %v355
      %v359 = vsub.f32 %v357, %v358
      %v360 = vmul.f32 %v353, %v354
      %v361 = vmul.f32 %v351, %v356
      %v362 = vsub.f32 %v360, %v361
      %v363 = vmul.f32 %v351, %v355
      %v364 = vmul.f32 %v352, %v354
      %v365 = vsub.f32 %v363, %v364
      %v366 = vsub.f32 %v346, %v334
      %v367 = vsub.f32 %v348, %v336
      %v368 = vsub.f32 %v350, %v338
      %v369 = vsub.f32 %v328, %v334
      %v370 = vsub.f32 %v330, %v336
      %v371 = vsub.f32 %v332, %v338
      %v372 = vmul.f32 %v367, %v371
      %v373 = vmul.f32 %v368, %v370
      %v374 = vsub.f32 %v372, %v373
      %v375 = vmul.f32 %v368, %v369
      %v376 = vmul.f32 %v366, %v371
      %v377 = vsub.f32 %v375, %v376
      %v378 = vmul.f32 %v366, %v370
      %v379 = vmul.f32 %v367, %v369
      %v380 = vsub.f32 %v378, %v379
      %v381 = vmul.f32 %v359, %v359
      %v382 = vmul.f32 %v362, %v362
      %v383 = vadd.f32 %v381, %v382
      %v384 = vmul.f32 %v365, %v365
      %v385 = vadd.f32 %v383, %v384
      %v386 = vmax.f32 %v385, 1e-30
      %v387 = vrsqrt.pop %v386
      %v388 = vmul.f32 %v374, %v374
      %v389 = vmul.f32 %v377, %v377
      %v390 = vadd.f32 %v388, %v389
      %v391 = vmul.f32 %v380, %v380
      %v392 = vadd.f32 %v390, %v391
      %v393 = vmax.f32 %v392, 1e-30
      %v394 = vrsqrt.pop %v393
      %v395 = vmul.f32 %v387, %v394
      %v396 = vmul.f32 %v359, %v374
      %v397 = vmul.f32 %v362, %v377
      %v398 = vadd.f32 %v396, %v397
      %v399 = vmul.f32 %v365, %v380
      %v400 = vadd.f32 %v398, %v399
      %v401 = vmul.f32 %v400, %v395
      %v402 = vsub.f32 0.0, %v401
      %v403 = vmax.f32 %v402, -1.0
      %v404 = vmin.f32 %v403, 1.0
      %v405 = vand.u32 2147483647, %v404
      %v406 = vmul.f32 %v405, -0.0012624911
      %v407 = vadd.f32 %v406, 0.00667009
      %v408 = vmul.f32 %v407, %v405
      %v409 = vadd.f32 %v408, -0.017088126
      %v410 = vmul.f32 %v409, %v405
      %v411 = vadd.f32 %v410, 0.03089188
      %v412 = vmul.f32 %v411, %v405
      %v413 = vadd.f32 %v412, -0.050174303
      %v414 = vmul.f32 %v413, %v405
      %v415 = vadd.f32 %v414, 0.08897899
      %v416 = vmul.f32 %v415, %v405
      %v417 = vadd.f32 %v416, -0.2145988
      %v418 = vmul.f32 %v417, %v405
      %v419 = vadd.f32 %v418, 1.5707963
      %v420 = vsub.f32 1.0, %v405
      %v421 = vmax.f32 %v420, 0.0
      %v422 = vrsqrt.pop %v421
      %v423 = vmul.f32 %v421, %v422
      %vm424 = vcmp.eq.f32.partialorder %v421, inf
      %v425 = vsel %vm424, %v421, %v423
      %vm426 = vcmp.eq.f32.partialorder %v421, 0.0
      %v427 = vand.u32 %v421, 2147483648
      %v428 = vsel %vm426, %v427, %v425
      %v429 = vmul.f32 %v428, %v419
      %vm430 = vcmp.ge.f32.partialorder %v404, 0.0
      %v431 = vsub.f32 3.1415927, %v429
      %v432 = vsel %vm430, %v429, %v431
      %v433 = vsub.f32 %v327, %v432
      %v434 = vmul.f32 %v433, %v433
      %p435 = scmp.eq.s32.totalorder %s20, 0
      // Predicated region
      $region29: #{mesh_dihedral_angle_loss.1} parent=27 // pred_check
        %p436 = pneg %p435
      $region30: #{mesh_dihedral_angle_loss.1} parent=27 // pred_check_branch
        %438 = sbr.rel (%p436) target = $region32
      $region31: #{mesh_dihedral_angle_loss.1} parent=27 // pred_region
        %439 = vst [vmem:[#allocation2] sm:$0xff] 0.0
      $region32: #{mesh_dihedral_angle_loss.1} parent=27 // pred_fallthru
        _
      %v440 = vld [vmem:[#allocation2] sm:$0xff]
      %v441 = vadd.f32 %v434, 0.0
      %v442 = vadd.f32 %v440, %v441
      %443 = vst [vmem:[#allocation2] sm:$0xff] %v442
      // Predicated region
      $region33: #{mesh_dihedral_angle_loss.1} parent=27 // pred_check
        %p444 = pneg %p435
      $region34: #{mesh_dihedral_angle_loss.1} parent=27 // pred_check_branch
        %446 = sbr.rel (%p444) target = $region36
      $region35: #{mesh_dihedral_angle_loss.1} parent=27 // pred_region
        %v447 = vld [vmem:[#allocation2] sm:$0xff]
        %448 = vadd.xlane.f32.xlu0 %v447
        %v449 = vpop.xlane.xlu0 %448
        %v450 = vrot.slane %v449, 4
        %v451 = vadd.f32 %v449, %v450
        %v452 = vrot.slane %v451, 2
        %v453 = vadd.f32 %v451, %v452
        %v454 = vrot.slane %v453, 1
        %v455 = vadd.f32 %v453, %v454
        %s456 = vtos %v455
        %v457 = vstv %s456
        %vm458 = vcmask 0
        %459 = vst.msk [vmem:[%s222] sm:$0x1] %vm458, %v457
      $region36: #{mesh_dihedral_angle_loss.1} parent=27 // pred_fallthru
        _
      %p460 = scmp.lt.s32.totalorder %s18, 1
      %s461 = scalar_select %p460, %s18, 1
      %p462 = scmp.lt.s32.totalorder %s19, 0
      %s463 = scalar_select %p462, %s19, 0
      %s464 = sadd.s32 %s463, %s461
      %s465 = scalar_lea.vmem %s2, %s464
      // Predicated region
      $region37: #{mesh_dihedral_angle_loss.1} parent=27 // pred_check
        %p466 = pneg %p112
      $region38: #{mesh_dihedral_angle_loss.1} parent=27 // pred_check_branch
        %468 = sbr.rel (%p466) target = $region40
      $region39: #{mesh_dihedral_angle_loss.1} parent=27 // pred_region
        _
      $region40: #{mesh_dihedral_angle_loss.1} parent=27 // pred_fallthru
        _
    $region28: #{mesh_dihedral_angle_loss.1} parent=5 // pred_fallthru
      _
    %p469 = scmp.le.s32.totalorder 2, %s8
    // Predicated region
    $region41: #{mesh_dihedral_angle_loss.1} parent=5 // pred_check
      %p470 = pneg %p469
    $region42: #{mesh_dihedral_angle_loss.1} parent=5 // pred_check_branch
      %472 = sbr.rel (%p470) target = $region44
    $region43: #{mesh_dihedral_angle_loss.1} parent=5 // pred_region
      %s473 = ssub.s32 %s8, 2
      // Predicated region
      $region45: #{mesh_dihedral_angle_loss.1} parent=43 // pred_check
        %p474 = pneg %p118
      $region46: #{mesh_dihedral_angle_loss.1} parent=43 // pred_check_branch
        %476 = sbr.rel (%p474) target = $region48
      $region47: #{mesh_dihedral_angle_loss.1} parent=43 // pred_region
        %p477 = scmp.lt.s32.totalorder %s21, 1
        %s478 = scalar_select %p477, %s21, 1
        %p479 = scmp.lt.s32.totalorder %s22, 0
        %s480 = scalar_select %p479, %s22, 0
        %s481 = sadd.s32 %s480, %s478
        %s482 = scalar_lea.vmem %s2, %s481
      $region48: #{mesh_dihedral_angle_loss.1} parent=43 // pred_fallthru
        _
    $region44: #{mesh_dihedral_angle_loss.1} parent=5 // pred_fallthru
      _
  $region6: #{mesh_dihedral_angle_loss.1} parent=0 // loop_footer
    %s12 = sadd.s32 1, %s8
  $region7: #{mesh_dihedral_angle_loss.1} parent=0 // loop_footer_branch
    %7 = sbr.rel target = $region3
  $region8: #{mesh_dihedral_angle_loss.1} parent=0 // loop_exit
    _

</llo_original>
